<compile_context>
chip_gen: v7x
topology: tpu7x:2x2x1
jax: 0.10.0
libtpu: 0.0.40
codegen_flags: <defaults>
</compile_context>

<pallas_src>
import functools

import jax
import jax.numpy as jnp
from jax.experimental import pallas as pl
from jax.experimental.pallas import tpu as pltpu


# ----------------------------- kernels -------------------------------------


def _attention_kernel(x_ref, attn_ref, e_acc, *, matmul_dtype):
    """Phase 1: accumulate energy = X @ X^T over N-tiles, then softmax.

    x_ref:    (bb, C, tn)   input tile (original dtype)
    attn_ref: (bb, C, C)    attention output (matmul_dtype)
    e_acc:    (bb, C, C)    f32 energy accumulator (VMEM scratch)
    """
    k = pl.program_id(1)

    @pl.when(k == 0)
    def _():
        e_acc[...] = jnp.zeros_like(e_acc)

    # bf16 (or matmul_dtype) MXU operands, f32 accumulation.
    xb = x_ref[...].astype(matmul_dtype)                       # (bb, C, tn)
    e_acc[...] += jnp.einsum('bcn,bdn->bcd', xb, xb,
                             preferred_element_type=jnp.float32)

    @pl.when(k == pl.num_programs(1) - 1)
    def _():
        energy = e_acc[...]                                    # (bb, C, C) f32
        # softmax(rowmax(E) - E) == exp(rowmin(E) - E) / sum(...):
        # single cross-lane reduction instead of max + max.
        e_min = jnp.min(energy, axis=-1, keepdims=True)
        p = jnp.exp(e_min - energy)
        inv = pl.reciprocal(jnp.sum(p, axis=-1, keepdims=True), approx=True)
        attn_ref[...] = (p * inv).astype(attn_ref.dtype)


def _output_kernel(gamma_ref, attn_ref, x_ref, o_ref, *, matmul_dtype):
    """Phase 2: out = gamma * (attention @ X) + X, per (batch-block, N-tile).

    gamma_ref: (1,) scalar in SMEM
    attn_ref:  (bb, C, C)   matmul_dtype
    x_ref:     (bb, C, tn)  original dtype
    o_ref:     (bb, C, tn)  original dtype (lane-dense: tn % 128 == 0)
    """
    gamma = gamma_ref[0]                     # read scalar once, up front
    x = x_ref[...]                           # (bb, C, tn)
    out = jnp.einsum('bcd,bdn->bcn', attn_ref[...], x.astype(matmul_dtype),
                     preferred_element_type=jnp.float32)
    o_ref[...] = (gamma * out + x.astype(jnp.float32)).astype(o_ref.dtype)


# ----------------------------- tiling helpers -------------------------------


def _pick_tile_n(n_padded, cap=2048):
    """Largest multiple of 128 that divides n_padded and is <= cap."""
    k = max(1, min(cap, n_padded) // 128)
    while k > 1:
        if n_padded % (k * 128) == 0:
            return k * 128
        k -= 1
    return 128


def _pick_block_b(batch, channels, tile_n, itemsize, budget_bytes):
    """Largest divisor of `batch` whose per-step working set fits the budget,
    keeping >= 2 batch blocks when batch >= 2 (so v7x's 2 TCs both get work)."""
    for cand in range(batch, 0, -1):
        if batch % cand:
            continue
        if batch >= 2 and batch // cand < 2:
            continue
        work = cand * channels * (2 * tile_n * itemsize + channels * 4 + channels * 2)
        if work <= budget_bytes:
            return cand
    return 1


# ----------------------------- wrapper --------------------------------------


def channel_attention(x_nchw, gamma, *, matmul_dtype=jnp.bfloat16,
                      tile_n_cap=2048, vmem_budget_bytes=4 * 1024 * 1024):
    """x_nchw: (B, C, H, W); gamma: scalar array of shape (1,)."""
    B, C, H, W = x_nchw.shape
    N = H * W
    x_flat = x_nchw.reshape(B, C, N)

    # Lane-dense spatial axis: pad N to a multiple of 128.  Zero padding is an
    # exact no-op for X @ X^T; padded output columns are sliced away below.
    n_pad = ((N + 127) // 128) * 128
    if n_pad != N:
        x_flat = jnp.pad(x_flat, ((0, 0), (0, 0), (0, n_pad - N)))

    tn = _pick_tile_n(n_pad, tile_n_cap)
    n_nt = n_pad // tn
    bb = _pick_block_b(B, C, tn, x_flat.dtype.itemsize, vmem_budget_bytes)
    n_bb = B // bb

    compiler_params = pltpu.CompilerParams(
        dimension_semantics=("parallel", "arbitrary"),
        vmem_limit_bytes=32 * 1024 * 1024)

    # Phase 1: per batch block, accumulate energy over N-tiles -> attention.
    attn = pl.pallas_call(
        functools.partial(_attention_kernel, matmul_dtype=matmul_dtype),
        out_shape=jax.ShapeDtypeStruct((B, C, C), matmul_dtype),
        grid_spec=pltpu.PrefetchScalarGridSpec(
            num_scalar_prefetch=0,
            grid=(n_bb, n_nt),
            in_specs=[
                pl.BlockSpec((bb, C, tn), lambda b, k: (b, 0, k)),   # x tiles
            ],
            out_specs=pl.BlockSpec((bb, C, C), lambda b, k: (b, 0, 0)),
            scratch_shapes=[pltpu.VMEM((bb, C, C), jnp.float32)],
        ),
        compiler_params=compiler_params,
    )(x_flat)

    # Phase 2: fully parallel (batch block, N-tile) grid for attn @ X + residual.
    out_flat = pl.pallas_call(
        functools.partial(_output_kernel, matmul_dtype=matmul_dtype),
        out_shape=jax.ShapeDtypeStruct((B, C, n_pad), x_flat.dtype),
        grid_spec=pltpu.PrefetchScalarGridSpec(
            num_scalar_prefetch=0,
            grid=(n_bb, n_nt),
            in_specs=[
                # gamma as a tiny SMEM-resident scalar input (read once in-body).
                pl.BlockSpec(memory_space=pltpu.MemorySpace.SMEM),
                pl.BlockSpec((bb, C, C), lambda b, k: (b, 0, 0)),    # attention
                pl.BlockSpec((bb, C, tn), lambda b, k: (b, 0, k)),   # x tiles
            ],
            out_specs=pl.BlockSpec((bb, C, tn), lambda b, k: (b, 0, k)),
        ),
        compiler_params=pltpu.CompilerParams(
            dimension_semantics=("parallel", "parallel"),
            vmem_limit_bytes=32 * 1024 * 1024),
    )(gamma, attn, x_flat)

    if n_pad != N:
        out_flat = out_flat[:, :, :N]
    return out_flat.reshape(B, C, H, W)


# ----------------------------- references -----------------------------------


def _reference_f32(x_nchw, gamma):
    B, C, H, W = x_nchw.shape
    x = x_nchw.reshape(B, C, H * W).astype(jnp.float32)
    energy = jnp.einsum('bcn,bdn->bcd', x, x)
    e_new = jnp.max(energy, axis=-1, keepdims=True) - energy
    attn = jax.nn.softmax(e_new, axis=-1)
    out = jnp.einsum('bcd,bdn->bcn', attn, x)
    out = gamma[0] * out + x
    return out.reshape(B, C, H, W)


def _reference_matched(x_nchw, gamma, matmul_dtype):
    """Same math, but with the kernel's matmul-operand dtype (f32 accumulation)."""
    B, C, H, W = x_nchw.shape
    x = x_nchw.reshape(B, C, H * W).astype(jnp.float32)
    xm = x.astype(matmul_dtype)
    energy = jnp.einsum('bcn,bdn->bcd', xm, xm,
                        preferred_element_type=jnp.float32)
    e_new = jnp.max(energy, axis=-1, keepdims=True) - energy
    attn = jax.nn.softmax(e_new, axis=-1).astype(matmul_dtype)
    out = jnp.einsum('bcd,bdn->bcn', attn, xm,
                     preferred_element_type=jnp.float32)
    out = gamma[0] * out + x
    return out.reshape(B, C, H, W)


# ----------------------------- test -----------------------------------------


if __name__ == "__main__":
    key = jax.random.PRNGKey(0)
    B, C, H, W = 2, 4, 16, 16
    x = jax.random.normal(key, (B, C, H, W), dtype=jnp.float32)

    # Parameter init per the module's __init__: gamma = zeros(1).
    # With gamma == 0 the kernel must return x exactly (pure residual path).
    gamma0 = jnp.zeros((1,), dtype=jnp.float32)
    out0 = jax.block_until_ready(channel_attention(x, gamma0))
    assert jnp.allclose(out0, x, atol=1e-6), "gamma=0 residual path mismatch"

    # Non-trivial gamma: default bf16-MXU path vs a dtype-matched reference.
    # Tolerance covers bf16 operand rounding + approx-reciprocal normalization
    # (both flagged as acceptable in the review).
    gamma = jnp.asarray([0.5], dtype=jnp.float32)
    out_bf16 = jax.block_until_ready(channel_attention(x, gamma))
    ref_bf16 = _reference_matched(x, gamma, jnp.bfloat16)
    assert jnp.allclose(out_bf16, ref_bf16, atol=5e-2, rtol=5e-2), "bf16 path mismatch"

    # Full-precision MXU path vs the exact f32 reference (only the EUP
    # approx-reciprocal differs) to confirm unchanged forward semantics.
    out_f32 = jax.block_until_ready(
        channel_attention(x, gamma, matmul_dtype=jnp.float32))
    ref_f32 = _reference_f32(x, gamma)
    assert jnp.allclose(out_f32, ref_f32, atol=2e-2, rtol=2e-2), "f32 path mismatch"

    print("KERNEL_OK")
</pallas_src>

<mosaic_0001>
module attributes {stable_mosaic.version = 11 : i64} {
  func.func @_attention_kernel(%arg0: i32, %arg1: i32, %arg2: memref<1x4x256xf32, #tpu.memory_space<vmem>>, %arg3: memref<1x4x4xbf16, #tpu.memory_space<vmem>>, %arg4: memref<1x4x4xf32, #tpu.memory_space<vmem>>) attributes {dimension_semantics = [#tpu.dimension_semantics<parallel>, #tpu.dimension_semantics<arbitrary>], iteration_bounds = array<i64: 2, 1>, scalar_prefetch = 0 : i64, scratch_operands = 1 : i64, tpu.core_type = #tpu.core_type<tc>, window_params = [{transform_indices = @transform_0, window_bounds = array<i64: 1, 4, 256>}, {transform_indices = @transform_1, window_bounds = array<i64: 1, 4, 4>}]} {
    %c0_i32 = arith.constant 0 : i32
    %0 = arith.cmpi eq, %arg1, %c0_i32 : i32
    %1 = arith.extui %0 : i1 to i32
    %c0_i32_0 = arith.constant 0 : i32
    %2 = arith.cmpi ne, %1, %c0_i32_0 : i32
    scf.if %2 {
      %cst_11 = arith.constant 0.000000e+00 : f32
      %12 = vector.broadcast %cst_11 : f32 to vector<1x4x4xf32>
      %c0_12 = arith.constant 0 : index
      %c0_13 = arith.constant 0 : index
      %c0_14 = arith.constant 0 : index
      %13 = vector.load %arg4[%c0_12, %c0_13, %c0_14] : memref<1x4x4xf32, #tpu.memory_space<vmem>>, vector<1x4x4xf32>
      tpu.vector_store %arg4[%c0_12, %c0_13, %c0_14], %12 {strides = array<i32>} : memref<1x4x4xf32, #tpu.memory_space<vmem>>, vector<1x4x4xf32>,
    } else {
    }
    %c0 = arith.constant 0 : index
    %c0_1 = arith.constant 0 : index
    %c0_2 = arith.constant 0 : index
    %3 = vector.load %arg2[%c0, %c0_1, %c0_2] : memref<1x4x256xf32, #tpu.memory_space<vmem>>, vector<1x4x256xf32>
    %4 = arith.truncf %3 : vector<1x4x256xf32> to vector<1x4x256xbf16>
    %c0_3 = arith.constant 0 : index
    %c0_4 = arith.constant 0 : index
    %c0_5 = arith.constant 0 : index
    %5 = vector.load %arg4[%c0_3, %c0_4, %c0_5] : memref<1x4x4xf32, #tpu.memory_space<vmem>>, vector<1x4x4xf32>
    "tpu.trace_start"() <{level = 10 : i32, message = "bcn,bdn->bcd"}> : () -> ()
    %cst = arith.constant dense<0.000000e+00> : vector<1x4x4xf32>
    %6 = tpu.matmul %4, %4, %cst {dimension_numbers = #tpu.dot_dimension_numbers<[2], [2], [1], [1], [0, 0, 0, 1, 1, 1], [0], [0]>} : vector<1x4x256xbf16>, vector<1x4x256xbf16>, vector<1x4x4xf32> -> vector<1x4x4xf32>
    "tpu.trace_stop"() : () -> ()
    %7 = arith.addf %5, %6 : vector<1x4x4xf32>
    %c0_6 = arith.constant 0 : index
    %c0_7 = arith.constant 0 : index
    %c0_8 = arith.constant 0 : index
    %8 = vector.load %arg4[%c0_6, %c0_7, %c0_8] : memref<1x4x4xf32, #tpu.memory_space<vmem>>, vector<1x4x4xf32>
    tpu.vector_store %arg4[%c0_6, %c0_7, %c0_8], %7 {strides = array<i32>} : memref<1x4x4xf32, #tpu.memory_space<vmem>>, vector<1x4x4xf32>,
    %c0_i32_9 = arith.constant 0 : i32
    %9 = arith.cmpi eq, %arg1, %c0_i32_9 : i32
    %10 = arith.extui %9 : i1 to i32
    %c0_i32_10 = arith.constant 0 : i32
    %11 = arith.cmpi ne, %10, %c0_i32_10 : i32
    scf.if %11 {
      %c0_11 = arith.constant 0 : index
      %c0_12 = arith.constant 0 : index
      %c0_13 = arith.constant 0 : index
      %12 = vector.load %arg4[%c0_11, %c0_12, %c0_13] : memref<1x4x4xf32, #tpu.memory_space<vmem>>, vector<1x4x4xf32>
      %cst_14 = arith.constant dense<0x7F800000> : vector<1x4xf32>
      %13 = vector.multi_reduction <minimumf>, %12, %cst_14 [2] : vector<1x4x4xf32> to vector<1x4xf32>
      %14 = vector.shape_cast %13 : vector<1x4xf32> to vector<1x4x1xf32>
      %15 = vector.broadcast %14 : vector<1x4x1xf32> to vector<1x4x4xf32>
      %16 = arith.subf %15, %12 : vector<1x4x4xf32>
      %17 = math.exp %16 : vector<1x4x4xf32>
      %cst_15 = arith.constant dense<0.000000e+00> : vector<1x4xf32>
      %18 = vector.multi_reduction <add>, %17, %cst_15 [2] : vector<1x4x4xf32> to vector<1x4xf32>
      %19 = vector.shape_cast %18 : vector<1x4xf32> to vector<1x4x1xf32>
      %20 = tpu.reciprocal %19 {approx = true} : vector<1x4x1xf32> -> vector<1x4x1xf32>
      %21 = vector.broadcast %20 : vector<1x4x1xf32> to vector<1x4x4xf32>
      %22 = arith.mulf %17, %21 : vector<1x4x4xf32>
      %23 = arith.truncf %22 : vector<1x4x4xf32> to vector<1x4x4xbf16>
      %c0_16 = arith.constant 0 : index
      %c0_17 = arith.constant 0 : index
      %c0_18 = arith.constant 0 : index
      %24 = vector.load %arg3[%c0_16, %c0_17, %c0_18] : memref<1x4x4xbf16, #tpu.memory_space<vmem>>, vector<1x4x4xbf16>
      tpu.vector_store %arg3[%c0_16, %c0_17, %c0_18], %23 {strides = array<i32>} : memref<1x4x4xbf16, #tpu.memory_space<vmem>>, vector<1x4x4xbf16>,
    } else {
    }
    return
  }
  func.func @transform_0(%arg0: i32, %arg1: i32) -> (i32, i32, i32) {
    %c0_i32 = arith.constant 0 : i32
    %c0_i32_0 = arith.constant 0 : i32
    return %arg0, %c0_i32, %arg1 : i32, i32, i32
  }
  func.func @transform_1(%arg0: i32, %arg1: i32) -> (i32, i32, i32) {
    %c0_i32 = arith.constant 0 : i32
    %c0_i32_0 = arith.constant 0 : i32
    %c0_i32_1 = arith.constant 0 : i32
    return %arg0, %c0_i32, %c0_i32_0 : i32, i32, i32
  }
}

</mosaic_0001>

<llo_original>
// kernel: tpu_custom_call.1
$region0: #{tpu_custom_call.1}
  #allocation0 [shape = 'u32[]', space=smem, size = 0x4, offset = 0x4, fixed_abs, tag = 'smem constant byte address 0x4 - core index']
  #allocation1 [shape = 'u32[144,128]{1,0:T(1,128)}', space=vmem, size = 0x12000, scoped, tag = 'internal scratch']
  #allocation2 [shape = 'f32[1,4,4]{2,1,0:T(4,128)}', space=vmem, size = 0x800, scoped, tag = 'scratch operand']
  %s0 = inlined_call_operand.hbm [shape: f32[2,4,256], index: 0, kind: input, shape index: {}]
  %s1 = inlined_call_operand.hbm [shape: bf16[2,4,4], index: 1, kind: output, shape index: {}]
  %s2 = sld [smem:[#allocation0]]
  $region49: #{tpu_custom_call.1} parent=0
    _
  %s4 = ssub.s32 1, %s2
  %s5 = scalar_select 0, %s4, %s2
  $region1: #{tpu_custom_call.1} parent=0
    #allocation3 [shape = 'u8[8192]{0}', space=vmem, size = 0x2000, scoped, tag = 'input window, operand 0']
    #allocation4 [shape = 's32[2]{0}', space=sflag, size = 0x8, scoped, tag = 'scoped memory for tpu_custom_call.1']
    #allocation5 [shape = 's32[2]{0}', space=sflag, size = 0x8, scoped, tag = 'scoped memory for tpu_custom_call.1']
    #allocation6 [shape = 'u8[2048]{0}', space=vmem, size = 0x800, scoped, tag = 'output window, operand 0']
    %6 = vsyncpa [#allocation4], 0
    %s7 = scalar_lea.sflag [#allocation4], 1
    %8 = vsyncpa %s7, 0
    %9 = vsyncpa [#allocation5], 0
    %s10 = scalar_lea.sflag [#allocation5], 1
    %11 = vsyncpa %s10, 0
    loop: start=0, step=1, limit=4
    $region2: #{tpu_custom_call.1} parent=1 // loop_pre_header
      _
    $region3: #{tpu_custom_call.1} parent=1 // loop_header
      %s13 = sphi 0, %s17
      %p14 = scmp.ge.s32.totalorder %s13, 4
      %s20 = sphi 0, %s32
      %s21 = sphi 0, %s28
      %s22 = sphi 0, %s20
      %s23 = sphi 0, %s21
      %s24 = sphi 0, %s22
      %s25 = sphi 0, %s23
      %s37 = sphi 0, %s39
      %s40 = sphi 0, %s37
      %s41 = sphi 0, %s40
      %s57 = sphi 0, %s41
      %s63 = sphi 0, %s65
      %s66 = sphi 0, %s63
      %s67 = sphi 0, %s66
      %s83 = sphi 0, %s67
    $region4: #{tpu_custom_call.1} parent=1 // loop_header_branch
      %16 = sbr.rel (%p14) target = $region8
    $region5: #{tpu_custom_call.1} parent=1 // loop_body
      %s18 = ssub.s32 %s13, 1
      %s19 = ssub.s32 %s13, 2
      %s26 = sadd.s32 1, %s21
      %p27 = scmp.ge.s32.totalorder %s26, 1
      %s28 = scalar_select %p27, 0, %s26
      %s29 = sadd.s32 1, %s20
      %s30 = scalar_select %p27, %s29, %s20
      %p31 = scmp.ge.s32.totalorder %s30, 2
      %s32 = scalar_select %p31, 0, %s30
      %s33 = ssub.s32 %s20, %s32
      %s34 = ssub.s32 %s21, %s28
      %s35 = sor.u32 %s33, %s34
      %p36 = scmp.eq.s32.totalorder %s35, 0
      %s38 = sadd.s32 %s37, 1
      %s39 = scalar_select %p36, %s37, %s38
      %p42 = pneg %p36
      %p43 = scmp.eq.s32.totalorder %s13, 1
      %p44 = por %p42, %p43
      %p45 = scmp.ne.s32.totalorder %s37, %s40
      %p46 = scmp.eq.s32.totalorder %s13, 0
      %p47 = por %p45, %p46
      %p48 = scmp.ne.s32.totalorder %s37, %s40
      %p49 = scmp.eq.s32.totalorder %s18, 1
      %p50 = por %p48, %p49
      %p51 = scmp.ne.s32.totalorder %s40, %s41
      %p52 = scmp.eq.s32.totalorder %s18, 0
      %p53 = por %p51, %p52
      %p54 = scmp.ne.s32.totalorder %s40, %s41
      %p55 = scmp.eq.s32.totalorder %s19, 1
      %p56 = por %p54, %p55
      %p58 = scmp.ne.s32.totalorder %s41, %s57
      %p59 = scmp.eq.s32.totalorder %s19, 0
      %p60 = por %p58, %p59
      %s61 = ssub.s32 %s20, %s32
      %p62 = scmp.eq.s32.totalorder %s61, 0
      %s64 = sadd.s32 %s63, 1
      %s65 = scalar_select %p62, %s63, %s64
      %p68 = pneg %p62
      %p69 = scmp.eq.s32.totalorder %s13, 1
      %p70 = por %p68, %p69
      %p71 = scmp.ne.s32.totalorder %s63, %s66
      %p72 = scmp.eq.s32.totalorder %s13, 0
      %p73 = por %p71, %p72
      %p74 = scmp.ne.s32.totalorder %s63, %s66
      %p75 = scmp.eq.s32.totalorder %s18, 1
      %p76 = por %p74, %p75
      %p77 = scmp.ne.s32.totalorder %s66, %s67
      %p78 = scmp.eq.s32.totalorder %s18, 0
      %p79 = por %p77, %p78
      %p80 = scmp.ne.s32.totalorder %s66, %s67
      %p81 = scmp.eq.s32.totalorder %s19, 1
      %p82 = por %p80, %p81
      %p84 = scmp.ne.s32.totalorder %s67, %s83
      %p85 = scmp.eq.s32.totalorder %s19, 0
      %p86 = por %p84, %p85
      %p87 = scmp.le.s32.totalorder 1, %s13
      %p88 = scmp.lt.s32.totalorder %s13, 3
      %p89 = pnand %p87, %p88
      %p90 = pneg %p89
      // Predicated region
      $region9: #{tpu_custom_call.1} parent=5 // pred_check
        _
      $region10: #{tpu_custom_call.1} parent=5 // pred_check_branch
        %92 = sbr.rel (%p89) target = $region12
      $region11: #{tpu_custom_call.1} parent=5 // pred_region
        %s93 = ssub.s32 %s13, 1
      $region12: #{tpu_custom_call.1} parent=5 // pred_fallthru
        _
      %p94 = scmp.lt.s32.totalorder %s13, 2
      // Predicated region
      $region13: #{tpu_custom_call.1} parent=5 // pred_check
        %p95 = pneg %p94
      $region14: #{tpu_custom_call.1} parent=5 // pred_check_branch
        %97 = sbr.rel (%p95) target = $region16
      $region15: #{tpu_custom_call.1} parent=5 // pred_region
        // Predicated region
        $region17: #{tpu_custom_call.1} parent=15 // pred_check
          %p98 = pneg %p47
        $region18: #{tpu_custom_call.1} parent=15 // pred_check_branch
          %100 = sbr.rel (%p98) target = $region20
        $region19: #{tpu_custom_call.1} parent=15 // pred_region
          %s101 = sand.u32 %s37, 1
          %s102 = scalar_lea.sflag [#allocation4], %s101
          %s103 = sand.u32 %s37, 1
          %s104 = smul.addr %s103, 8
          %s105 = scalar_lea.vmem [#allocation3], %s104
          %s106 = smul.u32 2, %s21
          %s108 = ssub.s32 128, 128
          %109 = vsyncadd %s102, %s108
          %s110 = smul.addr %s20, 2
          %s111 = sadd.s32 %s106, %s110
          %s112 = smul.addr %s111, 64
          %s113 = scalar_lea.hbm %s0, %s112
          %s115 = sshll.u32 %s105, 4
          %s116 = int_to_ptr.vmem [resolvable:$true] %s115
          %118 = dma.hbm_to_vmem [thread:$0]  %s113, 128, %s116, %s102
        $region20: #{tpu_custom_call.1} parent=15 // pred_fallthru
          _
      $region16: #{tpu_custom_call.1} parent=5 // pred_fallthru
        _
      %p119 = scmp.le.s32.totalorder 1, %s13
      %p120 = scmp.lt.s32.totalorder %s13, 3
      %p121 = pnand %p119, %p120
      %p122 = pneg %p121
      // Predicated region
      $region21: #{tpu_custom_call.1} parent=5 // pred_check
        _
      $region22: #{tpu_custom_call.1} parent=5 // pred_check_branch
        %124 = sbr.rel (%p121) target = $region24
      $region23: #{tpu_custom_call.1} parent=5 // pred_region
        %s125 = ssub.s32 %s13, 1
        %s126 = sand.u32 %s40, 1
        %s127 = scalar_lea.sflag [#allocation4], %s126
        %s128 = sand.u32 %s40, 1
        %s129 = smul.addr %s128, 8
        %s130 = scalar_lea.vmem [#allocation3], %s129
        // Predicated region
        $region25: #{tpu_custom_call.1} parent=23 // pred_check
          %p131 = pneg %p53
        $region26: #{tpu_custom_call.1} parent=23 // pred_check_branch
          %133 = sbr.rel (%p131) target = $region28
        $region27: #{tpu_custom_call.1} parent=23 // pred_region
          %134 = dma.done %s127, 128
        $region28: #{tpu_custom_call.1} parent=23 // pred_fallthru
          _
        %s135 = sand.u32 %s40, 1
        %s136 = scalar_lea.sflag [#allocation4], %s135
        %s137 = sand.u32 %s40, 1
        %s138 = smul.addr %s137, 8
        %s139 = scalar_lea.vmem [#allocation3], %s138
        %p140 = pneg %p53
        %p141 = pneg %p50
        %p142 = pneg %p79
        %p143 = pneg %p76
        %s144 = sand.u32 %s66, 1
        %s145 = scalar_lea.sflag [#allocation5], %s144
        %s146 = sand.u32 %s66, 1
        %s147 = smul.addr %s146, 2
        %s148 = scalar_lea.vmem [#allocation6], %s147
        %s149 = smul.u32 2, %s23
        %p151 = scmp.eq.s32.totalorder %s23, 0
        // Predicated region
        $region29: #{tpu_custom_call.1} parent=23 // pred_check
          %p152 = pneg %p151
        $region30: #{tpu_custom_call.1} parent=23 // pred_check_branch
          %154 = sbr.rel (%p152) target = $region32
        $region31: #{tpu_custom_call.1} parent=23 // pred_region
          %vm155 = vcmask 27648
          %156 = vst.msk [vmem:[#allocation2] sm:$0xf] %vm155, 0.0
        $region32: #{tpu_custom_call.1} parent=23 // pred_fallthru
          _
        %v157 = vld [vmem:[%s130] sm:$0xff]
        %v159 = vcombine.high %v157, %v157
        %v161 = vpack.c.bf16 %v157, %v157
        %v162 = vpack.c.bf16 %v159, %v159
        %v163 = vld [vmem:[#allocation2] sm:$0xf]
        %164 = vmatprep.subr.bf16.mxu0 %v162
        %165 = vmatpush1.bf16.xpose.msra.mxu0 %v161
        %166 = vmatprep.subr.bf16.mxu0 0
        %167 = vmatpush1.bf16.xpose.msra.mxu0 0
        %168 = vmatprep.subr.bf16.mxu0 0
        %169 = vmatpush1.bf16.xpose.msra.mxu0 0
        %170 = vmatprep.subr.bf16.mxu0 0
        %171 = vmatpush1.bf16.xpose.msra.mxu0 0
        %172 = vmatprep.subr.bf16.mxu0 0
        %173 = vmatpush1.bf16.xpose.msra.mxu0 0
        %174 = vmatprep.subr.bf16.mxu0 0
        %175 = vmatpush1.bf16.xpose.msra.mxu0 0
        %176 = vmatprep.subr.bf16.mxu0 0
        %177 = vmatpush1.bf16.xpose.msra.mxu0 0
        %178 = vmatprep.subr.bf16.mxu0 0
        %179 = vmatpush1.bf16.xpose.msra.mxu0 0
        %180 = vmatprep.subr.bf16.mxu0 0
        %181 = vmatpush1.bf16.xpose.msra.mxu0 0
        %182 = vmatprep.subr.bf16.mxu0 0
        %183 = vmatpush1.bf16.xpose.msra.mxu0 0
        %184 = vmatprep.subr.bf16.mxu0 0
        %185 = vmatpush1.bf16.xpose.msra.mxu0 0
        %186 = vmatprep.subr.bf16.mxu0 0
        %187 = vmatpush1.bf16.xpose.msra.mxu0 0
        %188 = vmatprep.subr.bf16.mxu0 0
        %189 = vmatpush1.bf16.xpose.msra.mxu0 0
        %190 = vmatprep.subr.bf16.mxu0 0
        %191 = vmatpush1.bf16.xpose.msra.mxu0 0
        %192 = vmatprep.subr.bf16.mxu0 0
        %193 = vmatpush1.bf16.xpose.msra.mxu0 0
        %194 = vmatprep.subr.bf16.mxu0 0
        %195 = vmatpush1.bf16.xpose.msra.mxu0 0
        %196 = vmatprep.mubr.bf16.mxu0 %v162
        %197 = vmatmul.mubr.bf16.gmra.mrb[0].mxu0 %v161
        %v198 = vpop.f32.mrb[0].mxu0
        %v199 = vadd.f32 0.0, %v198
        %v200 = vpop.f32.mrb[0].mxu0
        %v201 = vpop.f32.mrb[0].mxu0
        %v202 = vpop.f32.mrb[0].mxu0
        %203 = vdwg.mxu0
        %v204 = vadd.f32 %v163, %v199
        %vm205 = vcmask 27648
        %206 = vst.msk [vmem:[#allocation2] sm:$0xf] %vm205, %v204
        // Predicated region
        $region33: #{tpu_custom_call.1} parent=23 // pred_check
          %p207 = pneg %p151
        $region34: #{tpu_custom_call.1} parent=23 // pred_check_branch
          %209 = sbr.rel (%p207) target = $region36
        $region35: #{tpu_custom_call.1} parent=23 // pred_region
          %v210 = vld [vmem:[#allocation2] sm:$0xf]
          %v211 = vsel %vm205, %v210, inf
          %212 = vmin.xlane.f32.xlu0 %v211
          %v213 = vpop.xlane.xlu0 %212
          %v214 = vsub.f32 %v213, %v210
          %v215 = vmul.f32 %v214, 1.442695
          %v216 = vpow.pop %v215
          %v217 = vsel %vm205, %v216, 0.0
          %218 = vadd.xlane.f32.xlu0 %v217
          %v219 = vpop.xlane.xlu0 %218
          %v220 = vrcp.pop %v219
          %v221 = vmul.f32 %v216, %v220
          %v222 = vpack.c.bf16 %v221, %v221
          %vm223 = vcmask 25600
          %224 = vst.msk [vmem:[%s148] sm:$0x3] %vm223, %v222
        $region36: #{tpu_custom_call.1} parent=23 // pred_fallthru
          _
        %s225 = sand.u32 %s66, 1
        %s226 = scalar_lea.sflag [#allocation5], %s225
        %s227 = sand.u32 %s66, 1
        %s228 = smul.addr %s227, 2
        %s229 = scalar_lea.vmem [#allocation6], %s228
        // Predicated region
        $region37: #{tpu_custom_call.1} parent=23 // pred_check
          %p230 = pneg %p76
        $region38: #{tpu_custom_call.1} parent=23 // pred_check_branch
          %232 = sbr.rel (%p230) target = $region40
        $region39: #{tpu_custom_call.1} parent=23 // pred_region
          %s234 = ssub.s32 32, 32
          %235 = vsyncadd %s226, %s234
          %s236 = smul.addr %s22, 32
          %s237 = scalar_lea.hbm %s1, %s236
          %s239 = sshll.u32 %s229, 4
          %s240 = int_to_ptr.vmem [resolvable:$true] %s239
          %242 = dma.vmem_to_hbm [thread:$0]  %s240, 32, %s237, %s226
        $region40: #{tpu_custom_call.1} parent=23 // pred_fallthru
          _
      $region24: #{tpu_custom_call.1} parent=5 // pred_fallthru
        _
      %p243 = scmp.le.s32.totalorder 2, %s13
      // Predicated region
      $region41: #{tpu_custom_call.1} parent=5 // pred_check
        %p244 = pneg %p243
      $region42: #{tpu_custom_call.1} parent=5 // pred_check_branch
        %246 = sbr.rel (%p244) target = $region44
      $region43: #{tpu_custom_call.1} parent=5 // pred_region
        %s247 = ssub.s32 %s13, 2
        // Predicated region
        $region45: #{tpu_custom_call.1} parent=43 // pred_check
          %p248 = pneg %p82
        $region46: #{tpu_custom_call.1} parent=43 // pred_check_branch
          %250 = sbr.rel (%p248) target = $region48
        $region47: #{tpu_custom_call.1} parent=43 // pred_region
          %s251 = sand.u32 %s67, 1
          %s252 = scalar_lea.sflag [#allocation5], %s251
          %s253 = sand.u32 %s67, 1
          %s254 = smul.addr %s253, 2
          %s255 = scalar_lea.vmem [#allocation6], %s254
          %256 = dma.done %s252, 32
        $region48: #{tpu_custom_call.1} parent=43 // pred_fallthru
          _
      $region44: #{tpu_custom_call.1} parent=5 // pred_fallthru
        _
    $region6: #{tpu_custom_call.1} parent=1 // loop_footer
      %s17 = sadd.s32 1, %s13
    $region7: #{tpu_custom_call.1} parent=1 // loop_footer_branch
      %12 = sbr.rel target = $region3
    $region8: #{tpu_custom_call.1} parent=1 // loop_exit
      _
    %257 = vsyncpa [#allocation4], 1
    %s258 = scalar_lea.sflag [#allocation4], 1
    %259 = vsyncpa %s258, 1
    %260 = vsyncpa [#allocation5], 1
    %s261 = scalar_lea.sflag [#allocation5], 1
    %262 = vsyncpa %s261, 1

</llo_original>
